<compile_context>
chip_gen: v5e
topology: v5e:2x2
jax: 0.10.0
libtpu: 0.0.40
codegen_flags: <defaults>
</compile_context>

<pallas_src>
import jax
import jax.numpy as jnp
from jax.experimental import pallas as pl
from jax.experimental.pallas import tpu as pltpu


def ct_report_kernel(vis_ref,    # (bt, 1, Dv) f32   vision features
                     hid_ref,    # (bt, S, D)  f32   LLM last_hidden_state
                     wA_ref,     # (Dv, D)     f32   fused cross-attn weight
                     bA_ref,     # (1, D)      f32   fused cross-attn bias
                     gamma_ref,  # (1, D)      f32   LayerNorm gamma
                     beta_ref,   # (1, D)      f32   LayerNorm beta
                     wlm_ref,    # (D, vt)     bf16  lm_head vocab tile
                     out_ref,    # (bt, S, vt)       logits tile
                     xn_ref):    # (bt*S, D)   bf16  VMEM cache of LN output
    f32 = jnp.float32
    bt, S, D = hid_ref.shape

    # ---- per-batch-block prologue, computed once (vocab tile 0 only) -------
    @pl.when(pl.program_id(1) == 0)
    def _prologue():
        # cross-attention: single KV token => softmax == 1 (exact fold)
        vis = vis_ref[...][:, 0, :].astype(f32)                      # (bt, Dv)
        attn_row = jnp.dot(vis, wA_ref[...],
                           preferred_element_type=f32) + bA_ref[...]  # (bt, D)
        # residual + LayerNorm(eps=1e-5), f32 math (dropout = eval identity)
        x = hid_ref[...].astype(f32) + attn_row[:, None, :]          # (bt,S,D)
        mean = jnp.mean(x, axis=-1, keepdims=True)
        var = jnp.mean(jnp.square(x - mean), axis=-1, keepdims=True)
        xn = (x - mean) * jax.lax.rsqrt(var + 1e-5)
        xn = xn * gamma_ref[...] + beta_ref[...]
        xn_ref[...] = xn.reshape(bt * S, D).astype(xn_ref.dtype)

    # ---- steady-state: tall-M bf16 MXU matmul, f32 accumulation ------------
    logits = jnp.dot(xn_ref[...], wlm_ref[...],
                     preferred_element_type=f32)                     # (bt*S, vt)
    out_ref[...] = logits.reshape(bt, S, -1).astype(out_ref.dtype)


def _tpu_vmem_capacity_bytes():
    try:
        return int(pltpu.get_tpu_info().vmem_capacity_bytes)
    except Exception:
        return 64 * 1024 * 1024   # conservative fallback (v7x per-core VMEM)


def _pick_tiles(B, S, D, Dv, V, out_itemsize, budget_bytes):
    """Maximize bt first (fewest W_lm re-streams), then vt, within budget."""
    def vmem_est(bt, vt):
        return (2 * D * vt * 2                    # double-buffered bf16 W_lm
                + 2 * bt * S * vt * out_itemsize  # double-buffered logits tile
                + 2 * bt * S * D * 4              # hidden block
                + 2 * bt * Dv * 4                 # vision block
                + 2 * (Dv * D + 3 * D) * 4        # attn/LN weights + biases
                + bt * S * D * 2)                 # bf16 xn scratch

    divisors = [d for d in range(B, 0, -1) if B % d == 0]
    bt = next((d for d in divisors if vmem_est(d, 128) <= budget_bytes), 1)
    # If the whole batch fits in one block but halving keeps the MXU M-dim
    # large (>= 256 rows), split in two so a v7x megacore keeps both TCs busy.
    if bt == B and B % 2 == 0 and (B // 2) * S >= 256:
        bt = B // 2

    vt = 128
    for cand in (4096, 2048, 1024, 512, 256):     # multiples of 256 preferred
        if vmem_est(bt, cand) <= budget_bytes:
            vt = cand
            break
    vt = min(vt, pl.cdiv(max(V, 1), 128) * 128)   # never wider than padded V
    return bt, vt


def ct_report_generator_forward(hidden, vision, w_attn, b_attn, gamma, beta,
                                wlm, *, bt=None, vt=None,
                                out_dtype=jnp.float32):
    """hidden: [B,S,D], vision: [B,Dv], wlm: [D,V] bf16 -> logits [B,S,V]."""
    B, S, D = hidden.shape
    Dv = vision.shape[-1]
    V = wlm.shape[-1]

    cap = _tpu_vmem_capacity_bytes()
    tile_budget = int(cap * 0.6)                  # headroom for Mosaic scratch
    auto_bt, auto_vt = _pick_tiles(B, S, D, Dv, V,
                                   jnp.dtype(out_dtype).itemsize, tile_budget)
    bt = auto_bt if bt is None else bt
    vt = auto_vt if vt is None else vt
    assert B % bt == 0 and vt % 128 == 0

    # Pad vocab so every tile is full width (lane-dense, unmasked stores);
    # padded columns are zero weights and are sliced off below.
    V_pad = pl.cdiv(V, vt) * vt
    if V_pad != V:
        wlm = jnp.pad(wlm, ((0, 0), (0, V_pad - V)))

    vision3 = vision.reshape(B, 1, Dv)            # last-two block dims == full

    bmap3 = lambda b, j: (b, 0, 0)                # batch-blocked, vocab-invariant
    wmap2 = lambda b, j: (0, 0)                   # grid-invariant small weights

    # TODO(synk): passing `hidden` as bf16 would halve its HBM traffic; kept in
    # the caller's dtype here (LayerNorm math is f32 inside the kernel either way).
    logits = pl.pallas_call(
        ct_report_kernel,
        out_shape=jax.ShapeDtypeStruct((B, S, V_pad), out_dtype),
        grid=(B // bt, V_pad // vt),
        in_specs=[
            pl.BlockSpec((bt, 1, Dv), bmap3),               # vision
            pl.BlockSpec((bt, S, D), bmap3),                # last_hidden_state
            pl.BlockSpec((Dv, D), wmap2),                   # fused attn W
            pl.BlockSpec((1, D), wmap2),                    # fused attn b
            pl.BlockSpec((1, D), wmap2),                    # LN gamma
            pl.BlockSpec((1, D), wmap2),                    # LN beta
            pl.BlockSpec((D, vt), lambda b, j: (0, j)),     # lm_head vocab tile
        ],
        out_specs=pl.BlockSpec((bt, S, vt), lambda b, j: (b, 0, j)),
        scratch_shapes=[pltpu.VMEM((bt * S, D), jnp.bfloat16)],  # xn cache
        compiler_params=pltpu.CompilerParams(
            # batch blocks are independent (megacore sharding); vocab tiles
            # reuse the per-batch-block xn scratch, so they run sequentially.
            dimension_semantics=("parallel", "arbitrary"),
            vmem_limit_bytes=int(cap * 0.85)),
    )(vision3, hidden, w_attn, b_attn, gamma, beta, wlm)

    return logits[:, :, :V] if V_pad != V else logits


if __name__ == "__main__":
    # Small shapes consistent with the module's forward.
    B, C, Dpth, H, W = 2, 4, 4, 16, 16        # CT volume [B, C, depth, H, W]
    S, D, Dv, V = 8, 64, 32, 200              # seq, llm hidden, vision dim, vocab
    Npix = Dpth * H * W

    key = jax.random.PRNGKey(0)
    keys = jax.random.split(key, 16)
    n = lambda k, shp: jax.random.normal(k, shp, jnp.float32) * 0.02

    images = jax.random.normal(keys[0], (B, C, Dpth, H, W), jnp.float32)
    input_ids = jax.random.randint(keys[1], (B, S), 0, V)
    attention_mask = jnp.ones((B, S), jnp.float32)

    # ---- external-module stand-ins (plain JAX glue) ------------------------
    # TODO(synk): real vision_feature_extractor is an external module; stand-in
    #             = spatial mean-pool + projection C -> Dv.
    wp, bp = n(keys[2], (C, Dv)), n(keys[3], (1, Dv))
    pooled = jnp.mean(images.reshape(B, C, Npix), axis=-1)        # (B, C)
    vision = pooled @ wp + bp                                     # (B, Dv)

    # TODO(synk): real LLM transformer stack is an external module; stand-in
    #             = embedding lookup * attention_mask -> last_hidden_state.
    embed = n(keys[4], (V, D))
    hidden = embed[input_ids] * attention_mask[..., None]         # (B, S, D)

    # ---- CrossAttentionLayer weights (matmul-ready: y = x @ W + b) ---------
    # query / MHA in_proj(q,k) are dead with a single KV token (softmax over
    # one key is identically 1) and are never materialized.
    wv, bv = n(keys[5], (Dv, D)), n(keys[6], (1, D))    # value linear
    wvm, bvm = n(keys[7], (D, D)), n(keys[8], (1, D))   # MHA in_proj (v slice)
    wo, bo = n(keys[9], (D, D)), n(keys[10], (1, D))    # MHA out_proj
    gamma = jnp.ones((1, D), jnp.float32)               # LayerNorm gamma
    beta = jnp.zeros((1, D), jnp.float32)               # LayerNorm beta
    wlm = n(keys[11], (D, V))                           # lm_head (bias-free)

    # Offline exact fold of the 1-row attention chain (eval mode, 1 KV token):
    #   attn_row = ((vision @ Wv + bv) @ Wvm + bvm) @ Wo + bo
    w_attn = wv @ wvm @ wo                              # (Dv, D)
    b_attn = (bv @ wvm + bvm) @ wo + bo                 # (1, D)

    wlm_bf16 = wlm.astype(jnp.bfloat16)                 # narrow the big weight

    logits = ct_report_generator_forward(hidden, vision, w_attn, b_attn,
                                         gamma, beta, wlm_bf16)
    jax.block_until_ready(logits)
    assert logits.shape == (B, S, V)

    # ---- pure-JAX reference (same bf16 lm_head operands) -------------------
    attn_row = vision @ w_attn + b_attn
    x = hidden + attn_row[:, None, :]
    mean = x.mean(-1, keepdims=True)
    var = ((x - mean) ** 2).mean(-1, keepdims=True)
    xn = (x - mean) / jnp.sqrt(var + 1e-5) * gamma + beta
    ref = jnp.einsum("bsd,dv->bsv", xn.astype(jnp.bfloat16), wlm_bf16,
                     preferred_element_type=jnp.float32)
    assert jnp.allclose(logits, ref.astype(jnp.float32), atol=1e-2, rtol=1e-2), (
        float(jnp.max(jnp.abs(logits - ref.astype(jnp.float32)))))
    print("KERNEL_OK")
</pallas_src>

<mosaic_0001>
module attributes {stable_mosaic.version = 11 : i64} {
  func.func @ct_report_kernel(%arg0: i32, %arg1: i32, %arg2: memref<2x1x32xf32, #tpu.memory_space<vmem>>, %arg3: memref<2x8x64xf32, #tpu.memory_space<vmem>>, %arg4: memref<32x64xf32, #tpu.memory_space<vmem>>, %arg5: memref<1x64xf32, #tpu.memory_space<vmem>>, %arg6: memref<1x64xf32, #tpu.memory_space<vmem>>, %arg7: memref<1x64xf32, #tpu.memory_space<vmem>>, %arg8: memref<64x256xbf16, #tpu.memory_space<vmem>>, %arg9: memref<2x8x256xf32, #tpu.memory_space<vmem>>, %arg10: memref<16x64xbf16, #tpu.memory_space<vmem>>) attributes {dimension_semantics = [#tpu.dimension_semantics<parallel>, #tpu.dimension_semantics<arbitrary>], iteration_bounds = array<i64: 1, 1>, scalar_prefetch = 0 : i64, scratch_operands = 1 : i64, tpu.core_type = #tpu.core_type<tc>, window_params = [{transform_indices = @transform_0, window_bounds = array<i64: 2, 1, 32>}, {transform_indices = @transform_1, window_bounds = array<i64: 2, 8, 64>}, {pipeline_mode = #tpu.pipeline_mode<synchronous>, transform_indices = @transform_2, window_bounds = array<i64: 32, 64>}, {pipeline_mode = #tpu.pipeline_mode<synchronous>, transform_indices = @transform_3, window_bounds = array<i64: 1, 64>}, {pipeline_mode = #tpu.pipeline_mode<synchronous>, transform_indices = @transform_4, window_bounds = array<i64: 1, 64>}, {pipeline_mode = #tpu.pipeline_mode<synchronous>, transform_indices = @transform_5, window_bounds = array<i64: 1, 64>}, {transform_indices = @transform_6, window_bounds = array<i64: 64, 256>}, {transform_indices = @transform_7, window_bounds = array<i64: 2, 8, 256>}]} {
    %c0_i32 = arith.constant 0 : i32
    %0 = arith.cmpi eq, %arg1, %c0_i32 : i32
    %1 = arith.extui %0 : i1 to i32
    %c0_i32_0 = arith.constant 0 : i32
    %2 = arith.cmpi ne, %1, %c0_i32_0 : i32
    scf.if %2 {
      %c0_7 = arith.constant 0 : index
      %c0_8 = arith.constant 0 : index
      %c0_9 = arith.constant 0 : index
      %8 = vector.load %arg2[%c0_7, %c0_8, %c0_9] : memref<2x1x32xf32, #tpu.memory_space<vmem>>, vector<2x1x32xf32>
      %9 = vector.shape_cast %8 : vector<2x1x32xf32> to vector<2x32xf32>
      %c0_10 = arith.constant 0 : index
      %c0_11 = arith.constant 0 : index
      %10 = vector.load %arg4[%c0_10, %c0_11] : memref<32x64xf32, #tpu.memory_space<vmem>>, vector<32x64xf32>
      %cst_12 = arith.constant dense<0.000000e+00> : vector<2x64xf32>
      %11 = tpu.matmul %9, %10, %cst_12 {dimension_numbers = #tpu.dot_dimension_numbers<[1], [0], [0], [1], [0, 0, 1, 1], [], []>} : vector<2x32xf32>, vector<32x64xf32>, vector<2x64xf32> -> vector<2x64xf32>
      %c0_13 = arith.constant 0 : index
      %c0_14 = arith.constant 0 : index
      %12 = vector.load %arg5[%c0_13, %c0_14] : memref<1x64xf32, #tpu.memory_space<vmem>>, vector<1x64xf32>
      %13 = vector.broadcast %12 : vector<1x64xf32> to vector<2x64xf32>
      %14 = arith.addf %11, %13 : vector<2x64xf32>
      %c0_15 = arith.constant 0 : index
      %c0_16 = arith.constant 0 : index
      %c0_17 = arith.constant 0 : index
      %15 = vector.load %arg3[%c0_15, %c0_16, %c0_17] : memref<2x8x64xf32, #tpu.memory_space<vmem>>, vector<2x8x64xf32>
      %16 = vector.shape_cast %14 : vector<2x64xf32> to vector<2x1x64xf32>
      %17 = vector.broadcast %16 : vector<2x1x64xf32> to vector<2x8x64xf32>
      %18 = arith.addf %15, %17 : vector<2x8x64xf32>
      %cst_18 = arith.constant dense<0.000000e+00> : vector<2x8xf32>
      %19 = vector.multi_reduction <add>, %18, %cst_18 [2] : vector<2x8x64xf32> to vector<2x8xf32>
      %20 = vector.shape_cast %19 : vector<2x8xf32> to vector<2x8x1xf32>
      %cst_19 = arith.constant 6.400000e+01 : f32
      %21 = vector.broadcast %cst_19 : f32 to vector<2x8x1xf32>
      %22 = arith.divf %20, %21 : vector<2x8x1xf32>
      %23 = vector.broadcast %22 : vector<2x8x1xf32> to vector<2x8x64xf32>
      %24 = arith.subf %18, %23 : vector<2x8x64xf32>
      %25 = arith.mulf %24, %24 : vector<2x8x64xf32>
      %cst_20 = arith.constant dense<0.000000e+00> : vector<2x8xf32>
      %26 = vector.multi_reduction <add>, %25, %cst_20 [2] : vector<2x8x64xf32> to vector<2x8xf32>
      %27 = vector.shape_cast %26 : vector<2x8xf32> to vector<2x8x1xf32>
      %cst_21 = arith.constant 6.400000e+01 : f32
      %28 = vector.broadcast %cst_21 : f32 to vector<2x8x1xf32>
      %29 = arith.divf %27, %28 : vector<2x8x1xf32>
      %30 = vector.broadcast %22 : vector<2x8x1xf32> to vector<2x8x64xf32>
      %31 = arith.subf %18, %30 : vector<2x8x64xf32>
      %cst_22 = arith.constant 9.99999974E-6 : f32
      %32 = vector.broadcast %cst_22 : f32 to vector<2x8x1xf32>
      %33 = arith.addf %29, %32 : vector<2x8x1xf32>
      %34 = math.rsqrt %33 : vector<2x8x1xf32>
      %35 = vector.broadcast %34 : vector<2x8x1xf32> to vector<2x8x64xf32>
      %36 = arith.mulf %31, %35 : vector<2x8x64xf32>
      %c0_23 = arith.constant 0 : index
      %c0_24 = arith.constant 0 : index
      %37 = vector.load %arg6[%c0_23, %c0_24] : memref<1x64xf32, #tpu.memory_space<vmem>>, vector<1x64xf32>
      %38 = vector.shape_cast %37 : vector<1x64xf32> to vector<1x1x64xf32>
      %39 = vector.broadcast %38 : vector<1x1x64xf32> to vector<2x8x64xf32>
      %40 = arith.mulf %36, %39 : vector<2x8x64xf32>
      %c0_25 = arith.constant 0 : index
      %c0_26 = arith.constant 0 : index
      %41 = vector.load %arg7[%c0_25, %c0_26] : memref<1x64xf32, #tpu.memory_space<vmem>>, vector<1x64xf32>
      %42 = vector.shape_cast %41 : vector<1x64xf32> to vector<1x1x64xf32>
      %43 = vector.broadcast %42 : vector<1x1x64xf32> to vector<2x8x64xf32>
      %44 = arith.addf %40, %43 : vector<2x8x64xf32>
      %45 = vector.shape_cast %44 : vector<2x8x64xf32> to vector<16x64xf32>
      %46 = arith.truncf %45 : vector<16x64xf32> to vector<16x64xbf16>
      %c0_27 = arith.constant 0 : index
      %c0_28 = arith.constant 0 : index
      %47 = vector.load %arg10[%c0_27, %c0_28] : memref<16x64xbf16, #tpu.memory_space<vmem>>, vector<16x64xbf16>
      tpu.vector_store %arg10[%c0_27, %c0_28], %46 {strides = array<i32>} : memref<16x64xbf16, #tpu.memory_space<vmem>>, vector<16x64xbf16>,
    } else {
    }
    %c0 = arith.constant 0 : index
    %c0_1 = arith.constant 0 : index
    %3 = vector.load %arg10[%c0, %c0_1] : memref<16x64xbf16, #tpu.memory_space<vmem>>, vector<16x64xbf16>
    %c0_2 = arith.constant 0 : index
    %c0_3 = arith.constant 0 : index
    %4 = vector.load %arg8[%c0_2, %c0_3] : memref<64x256xbf16, #tpu.memory_space<vmem>>, vector<64x256xbf16>
    %cst = arith.constant dense<0.000000e+00> : vector<16x256xf32>
    %5 = tpu.matmul %3, %4, %cst {dimension_numbers = #tpu.dot_dimension_numbers<[1], [0], [0], [1], [0, 0, 1, 1], [], []>} : vector<16x64xbf16>, vector<64x256xbf16>, vector<16x256xf32> -> vector<16x256xf32>
    %6 = vector.shape_cast %5 : vector<16x256xf32> to vector<2x8x256xf32>
    %c0_4 = arith.constant 0 : index
    %c0_5 = arith.constant 0 : index
    %c0_6 = arith.constant 0 : index
    %7 = vector.load %arg9[%c0_4, %c0_5, %c0_6] : memref<2x8x256xf32, #tpu.memory_space<vmem>>, vector<2x8x256xf32>
    tpu.vector_store %arg9[%c0_4, %c0_5, %c0_6], %6 {strides = array<i32>} : memref<2x8x256xf32, #tpu.memory_space<vmem>>, vector<2x8x256xf32>,
    return
  }
  func.func @transform_0(%arg0: i32, %arg1: i32) -> (i32, i32, i32) {
    %c0_i32 = arith.constant 0 : i32
    %c0_i32_0 = arith.constant 0 : i32
    %c0_i32_1 = arith.constant 0 : i32
    return %arg0, %c0_i32, %c0_i32_0 : i32, i32, i32
  }
  func.func @transform_1(%arg0: i32, %arg1: i32) -> (i32, i32, i32) {
    %c0_i32 = arith.constant 0 : i32
    %c0_i32_0 = arith.constant 0 : i32
    %c0_i32_1 = arith.constant 0 : i32
    return %arg0, %c0_i32, %c0_i32_0 : i32, i32, i32
  }
  func.func @transform_2(%arg0: i32, %arg1: i32) -> (i32, i32) {
    %c0_i32 = arith.constant 0 : i32
    %c0_i32_0 = arith.constant 0 : i32
    %c0_i32_1 = arith.constant 0 : i32
    return %c0_i32, %c0_i32_0 : i32, i32
  }
  func.func @transform_3(%arg0: i32, %arg1: i32) -> (i32, i32) {
    %c0_i32 = arith.constant 0 : i32
    %c0_i32_0 = arith.constant 0 : i32
    %c0_i32_1 = arith.constant 0 : i32
    return %c0_i32, %c0_i32_0 : i32, i32
  }
  func.func @transform_4(%arg0: i32, %arg1: i32) -> (i32, i32) {
    %c0_i32 = arith.constant 0 : i32
    %c0_i32_0 = arith.constant 0 : i32
    %c0_i32_1 = arith.constant 0 : i32
    return %c0_i32, %c0_i32_0 : i32, i32
  }
  func.func @transform_5(%arg0: i32, %arg1: i32) -> (i32, i32) {
    %c0_i32 = arith.constant 0 : i32
    %c0_i32_0 = arith.constant 0 : i32
    %c0_i32_1 = arith.constant 0 : i32
    return %c0_i32, %c0_i32_0 : i32, i32
  }
  func.func @transform_6(%arg0: i32, %arg1: i32) -> (i32, i32) {
    %c0_i32 = arith.constant 0 : i32
    %c0_i32_0 = arith.constant 0 : i32
    return %c0_i32, %arg1 : i32, i32
  }
  func.func @transform_7(%arg0: i32, %arg1: i32) -> (i32, i32, i32) {
    %c0_i32 = arith.constant 0 : i32
    %c0_i32_0 = arith.constant 0 : i32
    return %arg0, %c0_i32, %arg1 : i32, i32, i32
  }
}

</mosaic_0001>

<llo_original>
// kernel: tpu_custom_call.1
$region0: #{tpu_custom_call.1}
  #allocation0 [shape = 'u32[]', space=smem, size = 0x4, offset = 0x4, fixed_abs, tag = 'smem constant byte address 0x4 - core index']
  #allocation1 [shape = 'u32[72,128]{1,0:T(1,128)}', space=vmem, size = 0x9000, scoped, tag = 'internal scratch']
  #allocation2 [shape = 'bf16[16,64]{1,0:T(8,128)(2,1)}', space=vmem, size = 0x1000, scoped, tag = 'scratch operand']
  %s0 = inlined_call_operand.hbm [shape: f32[2,1,32], index: 0, kind: input, shape index: {}]
  %s1 = inlined_call_operand.hbm [shape: f32[2,8,64], index: 1, kind: input, shape index: {}]
  %s2 = inlined_call_operand.hbm [shape: f32[32,64], index: 2, kind: input, shape index: {}]
  %s3 = inlined_call_operand.vmem [shape: f32[1,64], index: 3, kind: input, shape index: {}]
  %s4 = inlined_call_operand.vmem [shape: f32[1,64], index: 4, kind: input, shape index: {}]
  %s5 = inlined_call_operand.vmem [shape: f32[1,64], index: 5, kind: input, shape index: {}]
  %s6 = inlined_call_operand.hbm [shape: bf16[64,256], index: 6, kind: input, shape index: {}]
  %s7 = inlined_call_operand.hbm [shape: f32[2,8,256], index: 7, kind: output, shape index: {}]
  %s8 = sld [smem:[#allocation0]]
  $region58: #{tpu_custom_call.1} parent=0
    _
  %s10 = ssub.s32 1, %s8
  %s11 = scalar_select 0, %s10, %s8
  $region1: #{tpu_custom_call.1} parent=0
    #allocation3 [shape = 'u8[1024]{0}', space=vmem, size = 0x400, scoped, tag = 'input window, operand 0, single buffered']
    #allocation4 [shape = 's32[1]{0}', space=sflag, size = 0x4, scoped, tag = 'scoped memory for tpu_custom_call.1']
    #allocation5 [shape = 's32[1]{0}', space=sflag, size = 0x4, scoped, tag = 'scoped memory for tpu_custom_call.1']
    #allocation6 [shape = 'u8[8192]{0}', space=vmem, size = 0x2000, scoped, tag = 'input window, operand 1, single buffered']
    #allocation7 [shape = 's32[1]{0}', space=sflag, size = 0x4, scoped, tag = 'scoped memory for tpu_custom_call.1']
    #allocation8 [shape = 'u8[16384]{0}', space=vmem, size = 0x4000, scoped, tag = 'input window, operand 2, single buffered']
    #allocation9 [shape = 'u8[32768]{0}', space=vmem, size = 0x8000, scoped, tag = 'input window, operand 6, single buffered']
    #allocation10 [shape = 's32[1]{0}', space=sflag, size = 0x4, scoped, tag = 'scoped memory for tpu_custom_call.1']
    #allocation11 [shape = 'u8[16384]{0}', space=vmem, size = 0x4000, scoped, tag = 'output window, operand 0, single buffered']
    %12 = vsyncpa [#allocation4], 0
    %13 = vsyncpa [#allocation7], 0
    %14 = vsyncpa [#allocation10], 0
    %15 = vsyncpa [#allocation5], 0
    // Predicated region
    $region2: #{tpu_custom_call.1} parent=1 // pred_check
      _
    $region3: #{tpu_custom_call.1} parent=1 // pred_check_branch
      %17 = sbr.rel (0) target = $region5
    $region4: #{tpu_custom_call.1} parent=1 // pred_region
      %19 = vsyncadd [#allocation4], 0
      %s20 = sshll.u32 %s0, 4
      %s21 = int_to_ptr.hbm [resolvable:$true] %s20
      %s22 = sshll.u32 [#allocation3], 4
      %s23 = int_to_ptr.vmem [resolvable:$true] %s22
      %28 = dma.hbm_to_vmem [thread:$0]  %s21, 32, %s23, [#allocation4], 16, 16, 1
    $region5: #{tpu_custom_call.1} parent=1 // pred_fallthru
      _
    // Predicated region
    $region6: #{tpu_custom_call.1} parent=1 // pred_check
      _
    $region7: #{tpu_custom_call.1} parent=1 // pred_check_branch
      %30 = sbr.rel (0) target = $region9
    $region8: #{tpu_custom_call.1} parent=1 // pred_region
      %32 = vsyncadd [#allocation7], 0
      %s33 = sshll.u32 %s1, 4
      %s34 = int_to_ptr.hbm [resolvable:$true] %s33
      %s35 = sshll.u32 [#allocation6], 4
      %s36 = int_to_ptr.vmem [resolvable:$true] %s35
      %41 = dma.hbm_to_vmem [thread:$0]  %s34, 256, %s36, [#allocation7], 128, 128, 8
    $region9: #{tpu_custom_call.1} parent=1 // pred_fallthru
      _
    // Predicated region
    $region10: #{tpu_custom_call.1} parent=1 // pred_check
      _
    $region11: #{tpu_custom_call.1} parent=1 // pred_check_branch
      %43 = sbr.rel (0) target = $region13
    $region12: #{tpu_custom_call.1} parent=1 // pred_region
      %45 = vsyncadd [#allocation7], 0
      %s46 = sshll.u32 %s2, 4
      %s47 = int_to_ptr.hbm [resolvable:$true] %s46
      %s48 = sshll.u32 [#allocation8], 4
      %s49 = int_to_ptr.vmem [resolvable:$true] %s48
      %54 = dma.hbm_to_vmem [thread:$0]  %s47, 512, %s49, [#allocation7], 128, 128, 8
    $region13: #{tpu_custom_call.1} parent=1 // pred_fallthru
      _
    // Predicated region
    $region14: #{tpu_custom_call.1} parent=1 // pred_check
      _
    $region15: #{tpu_custom_call.1} parent=1 // pred_check_branch
      %56 = sbr.rel (0) target = $region17
    $region16: #{tpu_custom_call.1} parent=1 // pred_region
      _
    $region17: #{tpu_custom_call.1} parent=1 // pred_fallthru
      _
    // Predicated region
    $region18: #{tpu_custom_call.1} parent=1 // pred_check
      _
    $region19: #{tpu_custom_call.1} parent=1 // pred_check_branch
      %58 = sbr.rel (0) target = $region21
    $region20: #{tpu_custom_call.1} parent=1 // pred_region
      _
    $region21: #{tpu_custom_call.1} parent=1 // pred_fallthru
      _
    // Predicated region
    $region22: #{tpu_custom_call.1} parent=1 // pred_check
      _
    $region23: #{tpu_custom_call.1} parent=1 // pred_check_branch
      %60 = sbr.rel (0) target = $region25
    $region24: #{tpu_custom_call.1} parent=1 // pred_region
      _
    $region25: #{tpu_custom_call.1} parent=1 // pred_fallthru
      _
    // Predicated region
    $region26: #{tpu_custom_call.1} parent=1 // pred_check
      _
    $region27: #{tpu_custom_call.1} parent=1 // pred_check_branch
      %62 = sbr.rel (0) target = $region29
    $region28: #{tpu_custom_call.1} parent=1 // pred_region
      %64 = vsyncadd [#allocation10], 0
      %s65 = sshll.u32 %s6, 4
      %s66 = int_to_ptr.hbm [resolvable:$true] %s65
      %s67 = sshll.u32 [#allocation9], 4
      %s68 = int_to_ptr.vmem [resolvable:$true] %s67
      %73 = dma.hbm_to_vmem [thread:$0]  %s66, 1024, %s68, [#allocation10], 128, 128, 8
    $region29: #{tpu_custom_call.1} parent=1 // pred_fallthru
      _
    // Predicated region
    $region30: #{tpu_custom_call.1} parent=1 // pred_check
      _
    $region31: #{tpu_custom_call.1} parent=1 // pred_check_branch
      %75 = sbr.rel (0) target = $region33
    $region32: #{tpu_custom_call.1} parent=1 // pred_region
      %77 = dma.done [#allocation4], 32
    $region33: #{tpu_custom_call.1} parent=1 // pred_fallthru
      _
    // Predicated region
    $region34: #{tpu_custom_call.1} parent=1 // pred_check
      _
    $region35: #{tpu_custom_call.1} parent=1 // pred_check_branch
      %79 = sbr.rel (0) target = $region37
    $region36: #{tpu_custom_call.1} parent=1 // pred_region
      %81 = dma.done [#allocation7], 256
    $region37: #{tpu_custom_call.1} parent=1 // pred_fallthru
      _
    // Predicated region
    $region38: #{tpu_custom_call.1} parent=1 // pred_check
      _
    $region39: #{tpu_custom_call.1} parent=1 // pred_check_branch
      %83 = sbr.rel (0) target = $region41
    $region40: #{tpu_custom_call.1} parent=1 // pred_region
      %85 = dma.done [#allocation7], 512
    $region41: #{tpu_custom_call.1} parent=1 // pred_fallthru
      _
    // Predicated region
    $region42: #{tpu_custom_call.1} parent=1 // pred_check
      _
    $region43: #{tpu_custom_call.1} parent=1 // pred_check_branch
      %87 = sbr.rel (0) target = $region45
    $region44: #{tpu_custom_call.1} parent=1 // pred_region
      %89 = dma.done [#allocation10], 1024
    $region45: #{tpu_custom_call.1} parent=1 // pred_fallthru
      _
    %p91 = scmp.eq.s32.totalorder 0, 0
    // Predicated region
    $region46: #{tpu_custom_call.1} parent=1 // pred_check
      %p92 = pneg %p91
    $region47: #{tpu_custom_call.1} parent=1 // pred_check_branch
      %94 = sbr.rel (%p92) target = $region49
    $region48: #{tpu_custom_call.1} parent=1 // pred_region
      %v95 = vld [vmem:[#allocation3] sm:$0x1]
      %v96 = vld [vmem:[#allocation3 + $0x1] sm:$0x1]
      %v97 = vld [vmem:[#allocation8] sm:$0xff]
      %v98 = vld [vmem:[#allocation8 + $0x8] sm:$0xff]
      %v99 = vld [vmem:[#allocation8 + $0x10] sm:$0xff]
      %v100 = vld [vmem:[#allocation8 + $0x18] sm:$0xff]
      %v101 = vld [vmem:[%s3] sm:$0x1]
      %v103 = vperm.slane %v101, 0
      %107 = vst [vmem:[#allocation1] ss:$9 sm:$0xff] %v95
      %s108 = scalar_lea.vmem [#allocation1], 1
      %109 = vst [vmem:[%s108] ss:$9 sm:$0xff] %v96
      %v110 = vld [vmem:[#allocation1] sm:$0xff]
      %vm111 = vcmask 261120
      %v112 = vsel %vm111, %v110, 0
      %114 = vmatpush.msra.mxu0 0.0
      %115 = vmatpush.msra.mxu0 0.0
      %116 = vmatpush.msra.mxu0 0.0
      %117 = vmatpush.msra.mxu0 0.0
      %118 = vmatpush.msra.mxu0 0.0
      %119 = vmatpush.msra.mxu0 0.0
      %120 = vmatpush.msra.mxu0 0.0
      %121 = vmatpush.msra.mxu0 0.0
      %122 = vmatpush.msra.mxu0 0.0
      %123 = vmatpush.msra.mxu0 0.0
      %124 = vmatpush.msra.mxu0 0.0
      %125 = vmatpush.msra.mxu0 0.0
      %126 = vmatpush.msra.mxu0 %v100
      %127 = vmatpush.msra.mxu0 %v99
      %128 = vmatpush.msra.mxu0 %v98
      %129 = vmatpush.msra.mxu0 %v97
      %130 = vmatmul.f32.gmra.mxu0 %v112
      %v131 = vpop.f32.mrf.mxu0
      %v132 = vadd.f32 %v103, %v131
      %133 = vdwg.mxu0
      %v134 = vld [vmem:[#allocation6] sm:$0xff]
      %v135 = vld [vmem:[#allocation6 + $0x8] sm:$0xff]
      %v137 = vrot.slane %v132, 1
      %v138 = vperm.slane %v132, 0
      %v139 = vperm.slane %v137, 0
      %v142 = vadd.f32 %v134, %v138
      %v143 = vadd.f32 %v135, %v139
      %vm144 = vcmask 523264
      %v145 = vsel %vm144, %v142, 0.0
      %146 = vadd.xlane.f32.xlu0 %v145
      %v147 = vpop.xlane.xlu0 %146
      %v148 = vsel %vm144, %v143, 0.0
      %149 = vadd.xlane.f32.xlu0 %v148
      %v150 = vpop.xlane.xlu0 %149
      %v151 = vrcp.pop 64.0
      %v152 = vmul.f32 64.0, %v151
      %v153 = vsub.f32 1.0, %v152
      %v154 = vmul.f32 %v151, %v153
      %v155 = vadd.f32 %v151, %v154
      %vm156 = vweird.f32 %v151
      %v157 = vsel %vm156, %v151, %v155
      %v158 = vmul.f32 %v147, %v157
      %v159 = vmul.f32 %v150, %v157
      %v160 = vsub.f32 %v142, %v158
      %v161 = vsub.f32 %v143, %v159
      %v162 = vmul.f32 %v160, %v160
      %v163 = vmul.f32 %v161, %v161
      %v164 = vsel %vm144, %v162, 0.0
      %165 = vadd.xlane.f32.xlu0 %v164
      %v166 = vpop.xlane.xlu0 %165
      %v167 = vsel %vm144, %v163, 0.0
      %168 = vadd.xlane.f32.xlu0 %v167
      %v169 = vpop.xlane.xlu0 %168
      %v170 = vmul.f32 %v166, %v157
      %v171 = vmul.f32 %v169, %v157
      %v172 = vadd.f32 %v170, 1e-05
      %v173 = vadd.f32 %v171, 1e-05
      %v174 = vrsqrt.pop %v172
      %v175 = vmul.f32 %v174, %v172
      %v176 = vmul.f32 %v175, %v174
      %v177 = vmul.f32 0.5, %v176
      %v178 = vsub.f32 1.5, %v177
      %v179 = vmul.f32 %v174, %v178
      %vm180 = vweird.f32 %v172
      %vm181 = vweird.f32 %v174
      %vm182 = vmor %vm180, %vm181
      %v183 = vsel %vm182, %v174, %v179
      %v184 = vrsqrt.pop %v173
      %v185 = vmul.f32 %v184, %v173
      %v186 = vmul.f32 %v185, %v184
      %v187 = vmul.f32 0.5, %v186
      %v188 = vsub.f32 1.5, %v187
      %v189 = vmul.f32 %v184, %v188
      %vm190 = vweird.f32 %v173
      %vm191 = vweird.f32 %v184
      %vm192 = vmor %vm190, %vm191
      %v193 = vsel %vm192, %v184, %v189
      %v194 = vmul.f32 %v160, %v183
      %v195 = vmul.f32 %v161, %v193
      %v196 = vld [vmem:[%s4] sm:$0x1]
      %v198 = vperm.slane %v196, 0
      %v200 = vmul.f32 %v194, %v198
      %v201 = vmul.f32 %v195, %v198
      %v202 = vld [vmem:[%s5] sm:$0x1]
      %v204 = vperm.slane %v202, 0
      %v206 = vadd.f32 %v200, %v204
      %v207 = vadd.f32 %v201, %v204
      %v208 = vpack.c.bf16 %v206, %v206
      %v209 = vpack.c.bf16 %v207, %v207
      %vm210 = vcmask 519168
      %211 = vst.msk [vmem:[#allocation2] sm:$0xf] %vm210, %v208
      %212 = vst.msk [vmem:[#allocation2 + $0x4] sm:$0xf] %vm210, %v209
    $region49: #{tpu_custom_call.1} parent=1 // pred_fallthru
      _
    %v213 = vld [vmem:[#allocation2] sm:$0xf]
    %v214 = vld [vmem:[#allocation2 + $0x4] sm:$0xf]
    %v215 = vld [vmem:[#allocation9] sm:$0xff]
    %v216 = vld [vmem:[#allocation9 + $0x8] sm:$0xff]
    %v217 = vld [vmem:[#allocation9 + $0x10] sm:$0xff]
    %v218 = vld [vmem:[#allocation9 + $0x18] sm:$0xff]
    %v219 = vld [vmem:[#allocation9 + $0x20] sm:$0xff]
    %v220 = vld [vmem:[#allocation9 + $0x28] sm:$0xff]
    %v221 = vld [vmem:[#allocation9 + $0x30] sm:$0xff]
    %v222 = vld [vmem:[#allocation9 + $0x38] sm:$0xff]
    %v225 = vunpack.c.l.b16 %v213
    %v226 = vunpack.c.l.b16 %v214
    %v227 = vpack.c.b16 %v226, %v225
    %v236 = vunpack.c.l.b16 %v215
    %v237 = vunpack.c.h.b16 %v215
    %v238 = vunpack.c.l.b16 %v216
    %v239 = vunpack.c.h.b16 %v216
    %v240 = vunpack.c.l.b16 %v217
    %v241 = vunpack.c.h.b16 %v217
    %v242 = vunpack.c.l.b16 %v218
    %v243 = vunpack.c.h.b16 %v218
    %v244 = vunpack.c.l.b16 %v219
    %v245 = vunpack.c.h.b16 %v219
    %v246 = vunpack.c.l.b16 %v220
    %v247 = vunpack.c.h.b16 %v220
    %v248 = vunpack.c.l.b16 %v221
    %v249 = vunpack.c.h.b16 %v221
    %v250 = vunpack.c.l.b16 %v222
    %v251 = vunpack.c.h.b16 %v222
    %v252 = vpack.c.b16 %v238, %v236
    %v253 = vpack.c.b16 %v239, %v237
    %v254 = vpack.c.b16 %v242, %v240
    %v255 = vpack.c.b16 %v243, %v241
    %v256 = vpack.c.b16 %v246, %v244
    %v257 = vpack.c.b16 %v247, %v245
    %v258 = vpack.c.b16 %v250, %v248
    %v259 = vpack.c.b16 %v251, %v249
    %vm268 = vcmask 523264
    %v270 = vsel %vm268, %v227, 0
    %272 = vmatpush.bf16.msra.mxu0 0
    %273 = vmatpush.bf16.msra.mxu0 0
    %274 = vmatpush.bf16.msra.mxu0 0
    %275 = vmatpush.bf16.msra.mxu0 0
    %276 = vmatpush.bf16.msra.mxu0 %v258
    %277 = vmatpush.bf16.msra.mxu0 %v256
    %278 = vmatpush.bf16.msra.mxu0 %v254
    %279 = vmatpush.bf16.msra.mxu0 %v252
    %280 = vmatmul.bf16.gmra.mxu0 %v270
    %v281 = vpop.f32.mrf.mxu0
    %v282 = vadd.f32 0.0, %v281
    %v283 = vpop.f32.mrf.mxu0
    %v284 = vadd.f32 0.0, %v283
    %285 = vdwg.mxu0
    %286 = vmatpush.bf16.msra.mxu0 0
    %287 = vmatpush.bf16.msra.mxu0 0
    %288 = vmatpush.bf16.msra.mxu0 0
    %289 = vmatpush.bf16.msra.mxu0 0
    %290 = vmatpush.bf16.msra.mxu0 %v259
    %291 = vmatpush.bf16.msra.mxu0 %v257
    %292 = vmatpush.bf16.msra.mxu0 %v255
    %293 = vmatpush.bf16.msra.mxu0 %v253
    %294 = vmatmul.bf16.gmra.mxu0 %v270
    %v295 = vpop.f32.mrf.mxu0
    %v296 = vadd.f32 0.0, %v295
    %v297 = vpop.f32.mrf.mxu0
    %v298 = vadd.f32 0.0, %v297
    %299 = vdwg.mxu0
    %300 = vst [vmem:[#allocation11] sm:$0xff] %v282
    %301 = vst [vmem:[#allocation11 + $0x8] sm:$0xff] %v296
    %302 = vst [vmem:[#allocation11 + $0x10] sm:$0xff] %v284
    %303 = vst [vmem:[#allocation11 + $0x18] sm:$0xff] %v298
    // Predicated region
    $region50: #{tpu_custom_call.1} parent=1 // pred_check
      _
    $region51: #{tpu_custom_call.1} parent=1 // pred_check_branch
      %305 = sbr.rel (0) target = $region53
    $region52: #{tpu_custom_call.1} parent=1 // pred_region
      %307 = vsyncadd [#allocation5], 0
      %s308 = sshll.u32 [#allocation11], 4
      %s309 = int_to_ptr.vmem [resolvable:$true] %s308
      %s310 = sshll.u32 %s7, 4
      %s311 = int_to_ptr.hbm [resolvable:$true] %s310
      %316 = dma.vmem_to_hbm [thread:$0]  %s309, 512, %s311, [#allocation5], 256, 256, 16
    $region53: #{tpu_custom_call.1} parent=1 // pred_fallthru
      _
    // Predicated region
    $region54: #{tpu_custom_call.1} parent=1 // pred_check
      _
    $region55: #{tpu_custom_call.1} parent=1 // pred_check_branch
      %318 = sbr.rel (0) target = $region57
    $region56: #{tpu_custom_call.1} parent=1 // pred_region
      %320 = dma.done [#allocation5], 512
    $region57: #{tpu_custom_call.1} parent=1 // pred_fallthru
      _
    %321 = vsyncpa [#allocation4], 1
    %322 = vsyncpa [#allocation7], 1
    %323 = vsyncpa [#allocation10], 1
    %324 = vsyncpa [#allocation5], 1

</llo_original>
